<compile_context>
chip_gen: v5e
topology: v5e:2x2
jax: 0.10.0
libtpu: 0.0.40
codegen_flags: <defaults>
</compile_context>

<pallas_src>
import functools

import jax
import jax.numpy as jnp
from jax.experimental import pallas as pl
from jax.experimental.pallas import tpu as pltpu


def _round_up(x, m):
    return ((x + m - 1) // m) * m


def _heatmap_loss_kernel(pred_ref, gt_ref, out_ref, acc_ref, *, inv_d):
    # pred_ref / gt_ref: (TN, TD) tile (VMEM)
    # out_ref:           (TN, 1) per-sample mean squared error (f32)
    # acc_ref:           (TN, 1) f32 running sum scratch
    k = pl.program_id(1)

    @pl.when(k == 0)
    def _():
        acc_ref[...] = jnp.zeros_like(acc_ref)

    p = pred_ref[...].astype(jnp.float32)
    g = gt_ref[...].astype(jnp.float32)
    diff = p - g
    # Cross-lane reduce once per tile (XLU), accumulate in f32.
    acc_ref[...] += jnp.sum(diff * diff, axis=-1, keepdims=True)

    @pl.when(k == pl.num_programs(1) - 1)
    def _():
        out_ref[...] = (acc_ref[...] * inv_d).astype(out_ref.dtype)


def heatmap_loss(pred, gt, *, tn=8, td_max=4096):
    """Per-sample MSE over (C, H, W). pred/gt: (N, C, H, W) -> (N,) float32."""
    assert pred.shape == gt.shape
    n, c, h, w = pred.shape
    d = c * h * w

    pred2 = pred.reshape(n, d)
    gt2 = gt.reshape(n, d)

    # Choose a lane-dense D tile (multiple of 512 lanes, capped at td_max)
    # and pad N / D with zeros so every block is full.
    d_pad = _round_up(d, 512)
    if d_pad <= td_max:
        td = d_pad
    else:
        td = td_max
        d_pad = _round_up(d, td)
    n_pad = _round_up(n, tn)

    if (n_pad, d_pad) != (n, d):
        pred2 = jnp.pad(pred2, ((0, n_pad - n), (0, d_pad - d)))
        gt2 = jnp.pad(gt2, ((0, n_pad - n), (0, d_pad - d)))

    grid = (n_pad // tn, d_pad // td)

    kernel = functools.partial(_heatmap_loss_kernel, inv_d=1.0 / d)

    itemsize = jnp.dtype(pred.dtype).itemsize
    cost = pl.CostEstimate(
        flops=3 * n * d,
        transcendentals=0,
        bytes_accessed=2 * n * d * itemsize + n * 4,
    )

    out = pl.pallas_call(
        kernel,
        out_shape=jax.ShapeDtypeStruct((n_pad, 1), jnp.float32),
        grid_spec=pltpu.PrefetchScalarGridSpec(
            num_scalar_prefetch=0,
            grid=grid,
            in_specs=[
                pl.BlockSpec((tn, td), lambda i, k: (i, k)),
                pl.BlockSpec((tn, td), lambda i, k: (i, k)),
            ],
            out_specs=pl.BlockSpec((tn, 1), lambda i, k: (i, 0)),
            scratch_shapes=[pltpu.VMEM((tn, 1), jnp.float32)],
        ),
        compiler_params=pltpu.CompilerParams(
            dimension_semantics=("parallel", "arbitrary"),
        ),
        cost_estimate=cost,
    )(pred2, gt2)

    return out[:n, 0]


if __name__ == "__main__":
    key = jax.random.PRNGKey(0)
    k1, k2 = jax.random.split(key)

    N, C, H, W = 2, 4, 16, 16
    pred = jax.random.normal(k1, (N, C, H, W), dtype=jnp.float32)
    gt = jax.random.normal(k2, (N, C, H, W), dtype=jnp.float32)

    loss = heatmap_loss(pred, gt)
    loss = jax.block_until_ready(loss)

    # Pure-JAX reference check.
    ref = jnp.mean((pred - gt) ** 2, axis=(1, 2, 3))
    assert loss.shape == (N,)
    assert jnp.allclose(loss, ref, rtol=1e-5, atol=1e-5), (loss, ref)

    print("KERNEL_OK")
</pallas_src>

<mosaic_0001>
module attributes {stable_mosaic.version = 11 : i64} {
  func.func @_heatmap_loss_kernel(%arg0: i32, %arg1: i32, %arg2: memref<8x1024xf32, #tpu.memory_space<vmem>>, %arg3: memref<8x1024xf32, #tpu.memory_space<vmem>>, %arg4: memref<8x1xf32, #tpu.memory_space<vmem>>, %arg5: memref<8x1xf32, #tpu.memory_space<vmem>>) attributes {dimension_semantics = [#tpu.dimension_semantics<parallel>, #tpu.dimension_semantics<arbitrary>], iteration_bounds = array<i64: 1, 1>, scalar_prefetch = 0 : i64, scratch_operands = 1 : i64, tpu.core_type = #tpu.core_type<tc>, window_params = [{transform_indices = @transform_0, window_bounds = array<i64: 8, 1024>}, {transform_indices = @transform_1, window_bounds = array<i64: 8, 1024>}, {transform_indices = @transform_2, window_bounds = array<i64: 8, 1>}]} {
    %c0_i32 = arith.constant 0 : i32
    %0 = arith.cmpi eq, %arg1, %c0_i32 : i32
    %1 = arith.extui %0 : i1 to i32
    %c0_i32_0 = arith.constant 0 : i32
    %2 = arith.cmpi ne, %1, %c0_i32_0 : i32
    scf.if %2 {
      %cst_10 = arith.constant 0.000000e+00 : f32
      %15 = vector.broadcast %cst_10 : f32 to vector<8x1xf32>
      %c0_11 = arith.constant 0 : index
      %c0_12 = arith.constant 0 : index
      %16 = vector.load %arg5[%c0_11, %c0_12] : memref<8x1xf32, #tpu.memory_space<vmem>>, vector<8x1xf32>
      tpu.vector_store %arg5[%c0_11, %c0_12], %15 {strides = array<i32>} : memref<8x1xf32, #tpu.memory_space<vmem>>, vector<8x1xf32>,
    } else {
    }
    %c0 = arith.constant 0 : index
    %c0_1 = arith.constant 0 : index
    %3 = vector.load %arg2[%c0, %c0_1] : memref<8x1024xf32, #tpu.memory_space<vmem>>, vector<8x1024xf32>
    %c0_2 = arith.constant 0 : index
    %c0_3 = arith.constant 0 : index
    %4 = vector.load %arg3[%c0_2, %c0_3] : memref<8x1024xf32, #tpu.memory_space<vmem>>, vector<8x1024xf32>
    %5 = arith.subf %3, %4 : vector<8x1024xf32>
    %c0_4 = arith.constant 0 : index
    %c0_5 = arith.constant 0 : index
    %6 = vector.load %arg5[%c0_4, %c0_5] : memref<8x1xf32, #tpu.memory_space<vmem>>, vector<8x1xf32>
    %7 = arith.mulf %5, %5 : vector<8x1024xf32>
    %cst = arith.constant dense<0.000000e+00> : vector<8xf32>
    %8 = vector.multi_reduction <add>, %7, %cst [1] : vector<8x1024xf32> to vector<8xf32>
    %9 = vector.shape_cast %8 : vector<8xf32> to vector<8x1xf32>
    %10 = arith.addf %6, %9 : vector<8x1xf32>
    %c0_6 = arith.constant 0 : index
    %c0_7 = arith.constant 0 : index
    %11 = vector.load %arg5[%c0_6, %c0_7] : memref<8x1xf32, #tpu.memory_space<vmem>>, vector<8x1xf32>
    tpu.vector_store %arg5[%c0_6, %c0_7], %10 {strides = array<i32>} : memref<8x1xf32, #tpu.memory_space<vmem>>, vector<8x1xf32>,
    %c0_i32_8 = arith.constant 0 : i32
    %12 = arith.cmpi eq, %arg1, %c0_i32_8 : i32
    %13 = arith.extui %12 : i1 to i32
    %c0_i32_9 = arith.constant 0 : i32
    %14 = arith.cmpi ne, %13, %c0_i32_9 : i32
    scf.if %14 {
      %c0_10 = arith.constant 0 : index
      %c0_11 = arith.constant 0 : index
      %15 = vector.load %arg5[%c0_10, %c0_11] : memref<8x1xf32, #tpu.memory_space<vmem>>, vector<8x1xf32>
      %cst_12 = arith.constant 9.765625E-4 : f32
      %16 = vector.broadcast %cst_12 : f32 to vector<8x1xf32>
      %17 = arith.mulf %15, %16 : vector<8x1xf32>
      %c0_13 = arith.constant 0 : index
      %c0_14 = arith.constant 0 : index
      %18 = vector.load %arg4[%c0_13, %c0_14] : memref<8x1xf32, #tpu.memory_space<vmem>>, vector<8x1xf32>
      tpu.vector_store %arg4[%c0_13, %c0_14], %17 {strides = array<i32>} : memref<8x1xf32, #tpu.memory_space<vmem>>, vector<8x1xf32>,
    } else {
    }
    return
  }
  func.func @transform_0(%arg0: i32, %arg1: i32) -> (i32, i32) {
    %c0_i32 = arith.constant 0 : i32
    return %arg0, %arg1 : i32, i32
  }
  func.func @transform_1(%arg0: i32, %arg1: i32) -> (i32, i32) {
    %c0_i32 = arith.constant 0 : i32
    return %arg0, %arg1 : i32, i32
  }
  func.func @transform_2(%arg0: i32, %arg1: i32) -> (i32, i32) {
    %c0_i32 = arith.constant 0 : i32
    %c0_i32_0 = arith.constant 0 : i32
    return %arg0, %c0_i32 : i32, i32
  }
}

</mosaic_0001>

<llo_original>
// kernel: tpu_custom_call.1
$region0: #{tpu_custom_call.1}
  #allocation0 [shape = 'u32[]', space=smem, size = 0x4, offset = 0x4, fixed_abs, tag = 'smem constant byte address 0x4 - core index']
  #allocation1 [shape = 'u32[72,128]{1,0:T(1,128)}', space=vmem, size = 0x9000, scoped, tag = 'internal scratch']
  #allocation2 [shape = 'f32[8,1]{1,0:T(8,128)}', space=vmem, size = 0x1000, scoped, tag = 'scratch operand']
  %s0 = inlined_call_operand.hbm [shape: f32[8,1024], index: 0, kind: input, shape index: {}]
  %s1 = inlined_call_operand.hbm [shape: f32[8,1024], index: 1, kind: input, shape index: {}]
  %s2 = inlined_call_operand.vmem [shape: f32[8,1], index: 2, kind: output, shape index: {}]
  %s3 = sld [smem:[#allocation0]]
  $region34: #{tpu_custom_call.1} parent=0
    _
  %s5 = ssub.s32 1, %s3
  %s6 = scalar_select 0, %s5, %s3
  $region1: #{tpu_custom_call.1} parent=0
    #allocation3 [shape = 'u8[32768]{0}', space=vmem, size = 0x8000, scoped, tag = 'input window, operand 0, single buffered']
    #allocation4 [shape = 's32[1]{0}', space=sflag, size = 0x4, scoped, tag = 'scoped memory for tpu_custom_call.1']
    #allocation5 [shape = 'u8[32768]{0}', space=vmem, size = 0x8000, scoped, tag = 'input window, operand 1, single buffered']
    #allocation6 [shape = 's32[1]{0}', space=sflag, size = 0x4, scoped, tag = 'scoped memory for tpu_custom_call.1']
    %7 = vsyncpa [#allocation4], 0
    %8 = vsyncpa [#allocation6], 0
    // Predicated region
    $region2: #{tpu_custom_call.1} parent=1 // pred_check
      _
    $region3: #{tpu_custom_call.1} parent=1 // pred_check_branch
      %10 = sbr.rel (0) target = $region5
    $region4: #{tpu_custom_call.1} parent=1 // pred_region
      %12 = vsyncadd [#allocation4], 0
      %s14 = sshll.u32 %s0, 4
      %s15 = int_to_ptr.hbm [resolvable:$true] %s14
      %s16 = sshll.u32 [#allocation3], 4
      %s17 = int_to_ptr.vmem [resolvable:$true] %s16
      %19 = dma.hbm_to_vmem [thread:$0]  %s15, 1024, %s17, [#allocation4]
    $region5: #{tpu_custom_call.1} parent=1 // pred_fallthru
      _
    // Predicated region
    $region6: #{tpu_custom_call.1} parent=1 // pred_check
      _
    $region7: #{tpu_custom_call.1} parent=1 // pred_check_branch
      %21 = sbr.rel (0) target = $region9
    $region8: #{tpu_custom_call.1} parent=1 // pred_region
      %23 = vsyncadd [#allocation6], 0
      %s25 = sshll.u32 %s1, 4
      %s26 = int_to_ptr.hbm [resolvable:$true] %s25
      %s27 = sshll.u32 [#allocation5], 4
      %s28 = int_to_ptr.vmem [resolvable:$true] %s27
      %30 = dma.hbm_to_vmem [thread:$0]  %s26, 1024, %s28, [#allocation6]
    $region9: #{tpu_custom_call.1} parent=1 // pred_fallthru
      _
    // Predicated region
    $region10: #{tpu_custom_call.1} parent=1 // pred_check
      _
    $region11: #{tpu_custom_call.1} parent=1 // pred_check_branch
      %32 = sbr.rel (0) target = $region13
    $region12: #{tpu_custom_call.1} parent=1 // pred_region
      %34 = dma.done [#allocation4], 1024
    $region13: #{tpu_custom_call.1} parent=1 // pred_fallthru
      _
    // Predicated region
    $region14: #{tpu_custom_call.1} parent=1 // pred_check
      _
    $region15: #{tpu_custom_call.1} parent=1 // pred_check_branch
      %36 = sbr.rel (0) target = $region17
    $region16: #{tpu_custom_call.1} parent=1 // pred_region
      %38 = dma.done [#allocation6], 1024
    $region17: #{tpu_custom_call.1} parent=1 // pred_fallthru
      _
    %p39 = scmp.eq.s32.totalorder 0, 0
    // Predicated region
    $region18: #{tpu_custom_call.1} parent=1 // pred_check
      %p40 = pneg %p39
    $region19: #{tpu_custom_call.1} parent=1 // pred_check_branch
      %42 = sbr.rel (%p40) target = $region21
    $region20: #{tpu_custom_call.1} parent=1 // pred_region
      %vm43 = vcmask 7168
      %44 = vst.msk [vmem:[#allocation2] sm:$0xff] %vm43, 0.0
    $region21: #{tpu_custom_call.1} parent=1 // pred_fallthru
      _
    %v45 = vld [vmem:[#allocation3] sm:$0xff]
    %v46 = vld [vmem:[#allocation3 + $0x8] sm:$0xff]
    %v47 = vld [vmem:[#allocation3 + $0x10] sm:$0xff]
    %v48 = vld [vmem:[#allocation3 + $0x18] sm:$0xff]
    %v49 = vld [vmem:[#allocation3 + $0x20] sm:$0xff]
    %v50 = vld [vmem:[#allocation3 + $0x28] sm:$0xff]
    %v51 = vld [vmem:[#allocation3 + $0x30] sm:$0xff]
    %v52 = vld [vmem:[#allocation3 + $0x38] sm:$0xff]
    %v53 = vld [vmem:[#allocation5] sm:$0xff]
    %v54 = vld [vmem:[#allocation5 + $0x8] sm:$0xff]
    %v55 = vld [vmem:[#allocation5 + $0x10] sm:$0xff]
    %v56 = vld [vmem:[#allocation5 + $0x18] sm:$0xff]
    %v57 = vld [vmem:[#allocation5 + $0x20] sm:$0xff]
    %v58 = vld [vmem:[#allocation5 + $0x28] sm:$0xff]
    %v59 = vld [vmem:[#allocation5 + $0x30] sm:$0xff]
    %v60 = vld [vmem:[#allocation5 + $0x38] sm:$0xff]
    %v61 = vsub.f32 %v45, %v53
    %v62 = vsub.f32 %v46, %v54
    %v63 = vsub.f32 %v47, %v55
    %v64 = vsub.f32 %v48, %v56
    %v65 = vsub.f32 %v49, %v57
    %v66 = vsub.f32 %v50, %v58
    %v67 = vsub.f32 %v51, %v59
    %v68 = vsub.f32 %v52, %v60
    %v69 = vld [vmem:[#allocation2] sm:$0xff]
    %v70 = vmul.f32 %v61, %v61
    %v71 = vmul.f32 %v62, %v62
    %v72 = vmul.f32 %v63, %v63
    %v73 = vmul.f32 %v64, %v64
    %v74 = vmul.f32 %v65, %v65
    %v75 = vmul.f32 %v66, %v66
    %v76 = vmul.f32 %v67, %v67
    %v77 = vmul.f32 %v68, %v68
    %v78 = vadd.f32 %v70, %v71
    %v79 = vadd.f32 %v78, %v72
    %v80 = vadd.f32 %v79, %v73
    %v81 = vadd.f32 %v80, %v74
    %v82 = vadd.f32 %v81, %v75
    %v83 = vadd.f32 %v82, %v76
    %v84 = vadd.f32 %v83, %v77
    %85 = vadd.xlane.f32.xlu0 %v84
    %v86 = vpop.xlane.xlu0 %85
    %v87 = vadd.f32 %v69, %v86
    %vm88 = vcmask 7168
    %89 = vst.msk [vmem:[#allocation2] sm:$0xff] %vm88, %v87
    // Predicated region
    $region22: #{tpu_custom_call.1} parent=1 // pred_check
      %p90 = pneg %p39
    $region23: #{tpu_custom_call.1} parent=1 // pred_check_branch
      %92 = sbr.rel (%p90) target = $region25
    $region24: #{tpu_custom_call.1} parent=1 // pred_region
      %v93 = vld [vmem:[#allocation2] sm:$0xff]
      %v94 = vmul.f32 %v93, 0.0009765625
      %95 = vst.msk [vmem:[%s2] sm:$0xff] %vm88, %v94
    $region25: #{tpu_custom_call.1} parent=1 // pred_fallthru
      _
    // Predicated region
    $region26: #{tpu_custom_call.1} parent=1 // pred_check
      _
    $region27: #{tpu_custom_call.1} parent=1 // pred_check_branch
      %97 = sbr.rel (0) target = $region29
    $region28: #{tpu_custom_call.1} parent=1 // pred_region
      _
    $region29: #{tpu_custom_call.1} parent=1 // pred_fallthru
      _
    // Predicated region
    $region30: #{tpu_custom_call.1} parent=1 // pred_check
      _
    $region31: #{tpu_custom_call.1} parent=1 // pred_check_branch
      %99 = sbr.rel (0) target = $region33
    $region32: #{tpu_custom_call.1} parent=1 // pred_region
      _
    $region33: #{tpu_custom_call.1} parent=1 // pred_fallthru
      _
    %100 = vsyncpa [#allocation4], 1
    %101 = vsyncpa [#allocation6], 1

</llo_original>
